<compile_context>
chip_gen: v5e
topology: v5e:2x2
jax: 0.10.0
libtpu: 0.0.40
codegen_flags: <defaults>
</compile_context>

<pallas_src>
import functools

import jax
import jax.numpy as jnp
from jax.experimental import pallas as pl
from jax.experimental.pallas import tpu as pltpu


BN_EPS = 1e-5
LEAKY_SLOPE = 0.01            # PyTorch nn.LeakyReLU() default
SOFTPLUS_THRESHOLD = 20.0     # PyTorch nn.Softplus() default

# Row layout of the merged (8, z) statistics scratch (streaming path).
_S1_SUM, _S1_SQ, _S2_SUM, _S2_SQ, _BN1_A, _BN1_B, _BN2_A, _BN2_B = range(8)


def _round_up(a, b):
    return ((a + b - 1) // b) * b


def _leaky_relu(x):
    return jnp.where(x >= 0, x, LEAKY_SLOPE * x)


def _softplus(x):
    # PyTorch Softplus(beta=1, threshold=20)
    return jnp.where(x > SOFTPLUS_THRESHOLD, x,
                     jnp.log1p(jnp.exp(jnp.minimum(x, SOFTPLUS_THRESHOLD))))


def _rank2_linear(y_t, w1_ref, b1_ref):
    # Linear(2, z) as a VPU rank-2 update (a K=2 MXU matmul is ~all padding).
    return (y_t[:, 0:1] * w1_ref[0:1, :]
            + y_t[:, 1:2] * w1_ref[1:2, :]
            + b1_ref[...])


# --------------------------------------------------------------------------
# Fast path: whole batch in one grid step (NB == 1).
# --------------------------------------------------------------------------
def _single_tile_kernel(y_ref,
                        w1_ref, b1_ref, g1_ref, be1_ref,
                        w2_ref, b2_ref, g2_ref, be2_ref,
                        wh_ref, bh_ref,
                        mu_ref, sig_ref,
                        *, B, zp, needs_mask):
    inv_n = 1.0 / float(B)
    y_t = y_ref[...]
    h1 = _rank2_linear(y_t, w1_ref, b1_ref)

    if needs_mask:
        rows = jax.lax.broadcasted_iota(jnp.int32, (y_t.shape[0], 1), 0)
        mask = rows < B
    else:
        mask = None

    def bn_train(h, g_ref, be_ref):
        # Two-pass (centered) batch statistics: robust against cancellation.
        hm = h if mask is None else jnp.where(mask, h, 0.0)
        mean = jnp.sum(hm, axis=0, keepdims=True) * inv_n
        d = h - mean
        if mask is not None:
            d = jnp.where(mask, d, 0.0)
        var = jnp.sum(d * d, axis=0, keepdims=True) * inv_n
        sc = g_ref[...] * jax.lax.rsqrt(var + BN_EPS)
        return h * sc + (be_ref[...] - mean * sc)

    a1 = _leaky_relu(bn_train(h1, g1_ref, be1_ref))
    h2 = jnp.dot(a1, w2_ref[...], preferred_element_type=jnp.float32) + b2_ref[...]
    a2 = _leaky_relu(bn_train(h2, g2_ref, be2_ref))
    hd = jnp.dot(a2, wh_ref[...], preferred_element_type=jnp.float32) + bh_ref[...]

    # Lane-dense stores; softplus only on the sigma half.
    mu_ref[...] = hd[:, :zp].astype(mu_ref.dtype)
    sig_ref[...] = _softplus(hd[:, zp:]).astype(sig_ref.dtype)


# --------------------------------------------------------------------------
# Streaming path: 3 phases x NB batch tiles.
# --------------------------------------------------------------------------
def _streaming_kernel(y_ref,
                      w1_ref, b1_ref, g1_ref, be1_ref,
                      w2_ref, b2_ref, g2_ref, be2_ref,
                      wh_ref, bh_ref,
                      mu_ref, sig_ref,
                      stats, *h2_cache,
                      B, TB, zp, needs_mask, cache_h2):
    h2c = h2_cache[0] if cache_h2 else None
    phase = pl.program_id(0)
    i = pl.program_id(1)
    inv_n = 1.0 / float(B)

    if needs_mask:
        rows = jax.lax.broadcasted_iota(jnp.int32, (TB, 1), 0) + i * TB
        mask = rows < B
    else:
        mask = None

    def masked(h):
        return h if mask is None else jnp.where(mask, h, 0.0)

    def compute_h1():
        return _rank2_linear(y_ref[...], w1_ref, b1_ref)

    def bn1_apply(h1):
        return _leaky_relu(h1 * stats[_BN1_A:_BN1_A + 1, :]
                           + stats[_BN1_B:_BN1_B + 1, :])

    def compute_h2(a1):
        return (jnp.dot(a1, w2_ref[...], preferred_element_type=jnp.float32)
                + b2_ref[...])

    # ---- init accumulators at the very first grid step ----
    @pl.when((phase == 0) & (i == 0))
    def _():
        stats[_S1_SUM:_S2_SQ + 1, :] = jnp.zeros((4, stats.shape[1]),
                                                 jnp.float32)

    # ---- phase 0: BN1 batch statistics ----
    @pl.when(phase == 0)
    def _():
        # TODO(synk): single-pass E[x^2]-E[x]^2 can cancel when |mean| >> std;
        # the fast path uses a centered two-pass formula instead.
        h = masked(compute_h1())
        stats[_S1_SUM:_S1_SUM + 1, :] += jnp.sum(h, axis=0, keepdims=True)
        stats[_S1_SQ:_S1_SQ + 1, :] += jnp.sum(h * h, axis=0, keepdims=True)

    # ---- finalize BN1 -> affine scale/shift (start of phase 1) ----
    @pl.when((phase == 1) & (i == 0))
    def _():
        mean = stats[_S1_SUM:_S1_SUM + 1, :] * inv_n
        var = jnp.maximum(stats[_S1_SQ:_S1_SQ + 1, :] * inv_n - mean * mean, 0.0)
        sc = g1_ref[...] * jax.lax.rsqrt(var + BN_EPS)
        stats[_BN1_A:_BN1_A + 1, :] = sc
        stats[_BN1_B:_BN1_B + 1, :] = be1_ref[...] - mean * sc

    # ---- phase 1: compute h2 (optionally cached), BN2 statistics ----
    @pl.when(phase == 1)
    def _():
        h2 = compute_h2(bn1_apply(compute_h1()))
        if cache_h2:
            start = pl.multiple_of(i * TB, TB)
            h2c[pl.ds(start, TB), :] = h2
        h = masked(h2)
        stats[_S2_SUM:_S2_SUM + 1, :] += jnp.sum(h, axis=0, keepdims=True)
        stats[_S2_SQ:_S2_SQ + 1, :] += jnp.sum(h * h, axis=0, keepdims=True)

    # ---- finalize BN2 (start of phase 2) ----
    @pl.when((phase == 2) & (i == 0))
    def _():
        mean = stats[_S2_SUM:_S2_SUM + 1, :] * inv_n
        var = jnp.maximum(stats[_S2_SQ:_S2_SQ + 1, :] * inv_n - mean * mean, 0.0)
        sc = g2_ref[...] * jax.lax.rsqrt(var + BN_EPS)
        stats[_BN2_A:_BN2_A + 1, :] = sc
        stats[_BN2_B:_BN2_B + 1, :] = be2_ref[...] - mean * sc

    # ---- phase 2: normalize, fused head, lane-dense stores ----
    @pl.when(phase == 2)
    def _():
        if cache_h2:
            start = pl.multiple_of(i * TB, TB)
            h2 = h2c[pl.ds(start, TB), :]
        else:
            h2 = compute_h2(bn1_apply(compute_h1()))
        a2 = _leaky_relu(h2 * stats[_BN2_A:_BN2_A + 1, :]
                         + stats[_BN2_B:_BN2_B + 1, :])
        hd = (jnp.dot(a2, wh_ref[...], preferred_element_type=jnp.float32)
              + bh_ref[...])
        mu_ref[...] = hd[:, :zp].astype(mu_ref.dtype)
        sig_ref[...] = _softplus(hd[:, zp:]).astype(sig_ref.dtype)


# --------------------------------------------------------------------------
# Wrapper
# --------------------------------------------------------------------------
def y_prior_forward(params, x, y, m, *, batch_tile=None):
    """Pallas forward of y_prior. x and m mirror the PyTorch signature (unused)."""
    del x, m
    B = y.shape[0]
    z = params["w1"].shape[1]
    zp = _round_up(z, 128)                    # lane-dense per-head output width

    if batch_tile is None:
        TB = B if B <= 512 else 512
    else:
        TB = batch_tile
    TB = _round_up(max(TB, 8), 8)
    NB = (B + TB - 1) // TB
    B_pad = NB * TB
    needs_mask = (B_pad != B)

    y_in = y.astype(jnp.float32)
    if needs_mask:
        y_in = jnp.pad(y_in, ((0, B_pad - B), (0, 0)))

    # Fused, lane-padded mu|sigma head: [z, 2*zp]; mu in cols [0:z],
    # sigma in cols [zp:zp+z] (the rest is zero padding, sliced away later).
    wh = jnp.zeros((z, 2 * zp), jnp.float32)
    wh = wh.at[:, :z].set(params["wmu"]).at[:, zp:zp + z].set(params["wsig"])
    bh = jnp.zeros((1, 2 * zp), jnp.float32)
    bh = bh.at[:, :z].set(params["bmu"]).at[:, zp:zp + z].set(params["bsig"])

    weight_args = (params["w1"], params["b1"], params["g1"], params["be1"],
                   params["w2"], params["b2"], params["g2"], params["be2"],
                   wh, bh)

    out_shape = (jax.ShapeDtypeStruct((B_pad, zp), jnp.float32),
                 jax.ShapeDtypeStruct((B_pad, zp), jnp.float32))

    cost = pl.CostEstimate(
        flops=int(2 * B * z * (2 + z + 2 * zp)),
        transcendentals=int(2 * B * zp),
        bytes_accessed=int(4 * (B_pad * 2 + 2 * B_pad * zp
                                + z * (2 + z + 2 * zp) + 10 * z + 2 * zp)))

    if NB == 1:
        # ---------------- single-step fast path ----------------
        def full_spec(shape):
            return pl.BlockSpec(shape, lambda i: (0, 0))

        in_specs = [
            full_spec((TB, 2)),
            full_spec((2, z)), full_spec((1, z)), full_spec((1, z)), full_spec((1, z)),
            full_spec((z, z)), full_spec((1, z)), full_spec((1, z)), full_spec((1, z)),
            full_spec((z, 2 * zp)), full_spec((1, 2 * zp)),
        ]
        out_specs = (full_spec((TB, zp)), full_spec((TB, zp)))

        kernel = functools.partial(_single_tile_kernel,
                                   B=B, zp=zp, needs_mask=needs_mask)
        mu_pad, sig_pad = pl.pallas_call(
            kernel,
            out_shape=out_shape,
            grid=(1,),
            in_specs=in_specs,
            out_specs=out_specs,
            compiler_params=pltpu.CompilerParams(
                dimension_semantics=("arbitrary",)),
            cost_estimate=cost,
        )(y_in, *weight_args)
    else:
        # ---------------- streaming path: (3 phases, NB tiles) ----------------
        cache_h2 = (4 * B_pad * z) <= (8 * 2 ** 20)   # h2 cache fits in VMEM

        def const_spec(shape):
            return pl.BlockSpec(shape, lambda p, i: (0, 0))

        in_specs = [
            pl.BlockSpec((TB, 2), lambda p, i: (i, 0)),
            const_spec((2, z)), const_spec((1, z)), const_spec((1, z)), const_spec((1, z)),
            const_spec((z, z)), const_spec((1, z)), const_spec((1, z)), const_spec((1, z)),
            const_spec((z, 2 * zp)), const_spec((1, 2 * zp)),
        ]
        # Output block index only advances during phase 2 (p // 2 == 1 iff p == 2),
        # so each output block is written back to HBM exactly once.
        out_map = lambda p, i: (i * (p // 2), 0)
        out_specs = (pl.BlockSpec((TB, zp), out_map),
                     pl.BlockSpec((TB, zp), out_map))

        scratch = [pltpu.VMEM((8, z), jnp.float32)]
        if cache_h2:
            scratch.append(pltpu.VMEM((B_pad, z), jnp.float32))

        # Rough VMEM footprint; only raise the scoped limit if the 32 MiB
        # default might be exceeded (cap at 64 MiB = v7x physical VMEM).
        lane = lambda n: _round_up(max(n, 1), 128)
        est = 4 * (2 * (2 * lane(z) + 6 * 8 * lane(z) + z * lane(z)
                        + z * lane(2 * zp) + 8 * lane(2 * zp))
                   + 2 * (TB * 128 + 2 * TB * zp)
                   + 8 * lane(z) + (B_pad * z if cache_h2 else 0))
        vmem_limit = (int(min(64 * 2 ** 20, est + (4 << 20)))
                      if est > 30 * 2 ** 20 else None)

        kernel = functools.partial(_streaming_kernel, B=B, TB=TB, zp=zp,
                                   needs_mask=needs_mask, cache_h2=cache_h2)
        mu_pad, sig_pad = pl.pallas_call(
            kernel,
            out_shape=out_shape,
            grid=(3, NB),
            in_specs=in_specs,
            out_specs=out_specs,
            scratch_shapes=scratch,
            compiler_params=pltpu.CompilerParams(
                # Both axes must stay sequential: BN statistics accumulate in a
                # single shared scratch across the whole grid.
                dimension_semantics=("arbitrary", "arbitrary"),
                vmem_limit_bytes=vmem_limit),
            cost_estimate=cost,
        )(y_in, *weight_args)

    return mu_pad[:B, :z], sig_pad[:B, :z]


# --------------------------------------------------------------------------
# Parameter init + pure-JAX reference
# --------------------------------------------------------------------------
def init_params(key, z_dim):
    """Deterministic parameter init (PyTorch-style uniform fan-in bounds)."""
    ks = jax.random.split(key, 8)

    def linear(kw, kb, fan_in, fan_out):
        bound = 1.0 / jnp.sqrt(fan_in)
        w = jax.random.uniform(kw, (fan_in, fan_out), jnp.float32, -bound, bound)
        b = jax.random.uniform(kb, (1, fan_out), jnp.float32, -bound, bound)
        return w, b

    w1, b1 = linear(ks[0], ks[1], 2, z_dim)
    w2, b2 = linear(ks[2], ks[3], z_dim, z_dim)
    wmu, bmu = linear(ks[4], ks[5], z_dim, z_dim)
    wsig, bsig = linear(ks[6], ks[7], z_dim, z_dim)

    ones = jnp.ones((1, z_dim), jnp.float32)
    zeros = jnp.zeros((1, z_dim), jnp.float32)
    return dict(
        w1=w1, b1=b1, g1=ones, be1=zeros,
        w2=w2, b2=b2, g2=ones, be2=zeros,
        wmu=wmu, bmu=bmu, wsig=wsig, bsig=bsig,
    )


def _batchnorm_train(h, gamma, beta):
    mean = jnp.mean(h, axis=0, keepdims=True)
    var = jnp.mean((h - mean) ** 2, axis=0, keepdims=True)
    inv = jax.lax.rsqrt(var + BN_EPS)
    return (h - mean) * inv * gamma + beta


def reference_forward(params, y):
    """Pure-JAX reference for sanity checking the kernel."""
    h = y @ params["w1"] + params["b1"]
    h = _leaky_relu(_batchnorm_train(h, params["g1"], params["be1"]))
    h = h @ params["w2"] + params["b2"]
    h = _leaky_relu(_batchnorm_train(h, params["g2"], params["be2"]))
    mu = h @ params["wmu"] + params["bmu"]
    sigma = _softplus(h @ params["wsig"] + params["bsig"])
    return mu, sigma


if __name__ == "__main__":
    B = 8
    Z_DIM = 32

    key = jax.random.PRNGKey(0)
    k_par, k_x, k_y, k_m, k_y2 = jax.random.split(key, 5)

    params = init_params(k_par, Z_DIM)

    # Forward signature is (x, y, m); only y (shape [B, 2]) is consumed.
    x = jax.random.normal(k_x, (B, Z_DIM), jnp.float32)   # unused, mirrors API
    y = jax.random.normal(k_y, (B, 2), jnp.float32)
    m = jax.random.normal(k_m, (B, 1), jnp.float32)       # unused, mirrors API

    # ---- fast path (NB == 1) ----
    mu, sigma = y_prior_forward(params, x, y, m)
    jax.block_until_ready((mu, sigma))

    mu_ref, sigma_ref = reference_forward(params, y)
    assert mu.shape == (B, Z_DIM) and sigma.shape == (B, Z_DIM)
    assert jnp.allclose(mu, mu_ref, atol=1e-4, rtol=1e-4)
    assert jnp.allclose(sigma, sigma_ref, atol=1e-4, rtol=1e-4)
    assert bool(jnp.all(sigma > 0))

    # ---- streaming path (3-phase grid, padded last tile) ----
    B2 = 28
    y2 = jax.random.normal(k_y2, (B2, 2), jnp.float32)
    mu2, sigma2 = y_prior_forward(params, None, y2, None, batch_tile=8)
    jax.block_until_ready((mu2, sigma2))

    mu2_ref, sigma2_ref = reference_forward(params, y2)
    assert mu2.shape == (B2, Z_DIM) and sigma2.shape == (B2, Z_DIM)
    assert jnp.allclose(mu2, mu2_ref, atol=1e-4, rtol=1e-4)
    assert jnp.allclose(sigma2, sigma2_ref, atol=1e-4, rtol=1e-4)

    print("KERNEL_OK")
</pallas_src>

<mosaic_0001>
module attributes {stable_mosaic.version = 11 : i64} {
  func.func @_single_tile_kernel(%arg0: i32, %arg1: memref<8x2xf32, #tpu.memory_space<vmem>>, %arg2: memref<2x32xf32, #tpu.memory_space<vmem>>, %arg3: memref<1x32xf32, #tpu.memory_space<vmem>>, %arg4: memref<1x32xf32, #tpu.memory_space<vmem>>, %arg5: memref<1x32xf32, #tpu.memory_space<vmem>>, %arg6: memref<32x32xf32, #tpu.memory_space<vmem>>, %arg7: memref<1x32xf32, #tpu.memory_space<vmem>>, %arg8: memref<1x32xf32, #tpu.memory_space<vmem>>, %arg9: memref<1x32xf32, #tpu.memory_space<vmem>>, %arg10: memref<32x256xf32, #tpu.memory_space<vmem>>, %arg11: memref<1x256xf32, #tpu.memory_space<vmem>>, %arg12: memref<8x128xf32, #tpu.memory_space<vmem>>, %arg13: memref<8x128xf32, #tpu.memory_space<vmem>>) attributes {dimension_semantics = [#tpu.dimension_semantics<arbitrary>], iteration_bounds = array<i64: 1>, scalar_prefetch = 0 : i64, scratch_operands = 0 : i64, tpu.core_type = #tpu.core_type<tc>, window_params = [{pipeline_mode = #tpu.pipeline_mode<synchronous>, transform_indices = @transform_0, window_bounds = array<i64: 8, 2>}, {pipeline_mode = #tpu.pipeline_mode<synchronous>, transform_indices = @transform_1, window_bounds = array<i64: 2, 32>}, {pipeline_mode = #tpu.pipeline_mode<synchronous>, transform_indices = @transform_2, window_bounds = array<i64: 1, 32>}, {pipeline_mode = #tpu.pipeline_mode<synchronous>, transform_indices = @transform_3, window_bounds = array<i64: 1, 32>}, {pipeline_mode = #tpu.pipeline_mode<synchronous>, transform_indices = @transform_4, window_bounds = array<i64: 1, 32>}, {pipeline_mode = #tpu.pipeline_mode<synchronous>, transform_indices = @transform_5, window_bounds = array<i64: 32, 32>}, {pipeline_mode = #tpu.pipeline_mode<synchronous>, transform_indices = @transform_6, window_bounds = array<i64: 1, 32>}, {pipeline_mode = #tpu.pipeline_mode<synchronous>, transform_indices = @transform_7, window_bounds = array<i64: 1, 32>}, {pipeline_mode = #tpu.pipeline_mode<synchronous>, transform_indices = @transform_8, window_bounds = array<i64: 1, 32>}, {pipeline_mode = #tpu.pipeline_mode<synchronous>, transform_indices = @transform_9, window_bounds = array<i64: 32, 256>}, {pipeline_mode = #tpu.pipeline_mode<synchronous>, transform_indices = @transform_10, window_bounds = array<i64: 1, 256>}, {pipeline_mode = #tpu.pipeline_mode<synchronous>, transform_indices = @transform_11, window_bounds = array<i64: 8, 128>}, {pipeline_mode = #tpu.pipeline_mode<synchronous>, transform_indices = @transform_12, window_bounds = array<i64: 8, 128>}]} {
    %c0 = arith.constant 0 : index
    %c0_0 = arith.constant 0 : index
    %0 = vector.load %arg1[%c0, %c0_0] : memref<8x2xf32, #tpu.memory_space<vmem>>, vector<8x2xf32>
    %1 = vector.extract_strided_slice %0 {offsets = [0, 0], sizes = [8, 1], strides = [1, 1]} : vector<8x2xf32> to vector<8x1xf32>
    %c0_1 = arith.constant 0 : index
    %c0_2 = arith.constant 0 : index
    %2 = vector.load %arg2[%c0_1, %c0_2] : memref<2x32xf32, #tpu.memory_space<vmem>>, vector<1x32xf32>
    %3 = vector.broadcast %1 : vector<8x1xf32> to vector<8x32xf32>
    %4 = vector.broadcast %2 : vector<1x32xf32> to vector<8x32xf32>
    %5 = arith.mulf %3, %4 : vector<8x32xf32>
    %6 = vector.extract_strided_slice %0 {offsets = [0, 1], sizes = [8, 1], strides = [1, 1]} : vector<8x2xf32> to vector<8x1xf32>
    %c1 = arith.constant 1 : index
    %c0_3 = arith.constant 0 : index
    %7 = vector.load %arg2[%c1, %c0_3] : memref<2x32xf32, #tpu.memory_space<vmem>>, vector<1x32xf32>
    %8 = vector.broadcast %6 : vector<8x1xf32> to vector<8x32xf32>
    %9 = vector.broadcast %7 : vector<1x32xf32> to vector<8x32xf32>
    %10 = arith.mulf %8, %9 : vector<8x32xf32>
    %11 = arith.addf %5, %10 : vector<8x32xf32>
    %c0_4 = arith.constant 0 : index
    %c0_5 = arith.constant 0 : index
    %12 = vector.load %arg3[%c0_4, %c0_5] : memref<1x32xf32, #tpu.memory_space<vmem>>, vector<1x32xf32>
    %13 = vector.broadcast %12 : vector<1x32xf32> to vector<8x32xf32>
    %14 = arith.addf %11, %13 : vector<8x32xf32>
    %cst = arith.constant dense<0.000000e+00> : vector<32xf32>
    %15 = vector.multi_reduction <add>, %14, %cst [0] : vector<8x32xf32> to vector<32xf32>
    %16 = vector.shape_cast %15 : vector<32xf32> to vector<1x32xf32>
    %cst_6 = arith.constant 1.250000e-01 : f32
    %17 = vector.broadcast %cst_6 : f32 to vector<1x32xf32>
    %18 = arith.mulf %16, %17 : vector<1x32xf32>
    %19 = vector.broadcast %18 : vector<1x32xf32> to vector<8x32xf32>
    %20 = arith.subf %14, %19 : vector<8x32xf32>
    %21 = arith.mulf %20, %20 : vector<8x32xf32>
    %cst_7 = arith.constant dense<0.000000e+00> : vector<32xf32>
    %22 = vector.multi_reduction <add>, %21, %cst_7 [0] : vector<8x32xf32> to vector<32xf32>
    %23 = vector.shape_cast %22 : vector<32xf32> to vector<1x32xf32>
    %cst_8 = arith.constant 1.250000e-01 : f32
    %24 = vector.broadcast %cst_8 : f32 to vector<1x32xf32>
    %25 = arith.mulf %23, %24 : vector<1x32xf32>
    %c0_9 = arith.constant 0 : index
    %c0_10 = arith.constant 0 : index
    %26 = vector.load %arg4[%c0_9, %c0_10] : memref<1x32xf32, #tpu.memory_space<vmem>>, vector<1x32xf32>
    %cst_11 = arith.constant 9.99999974E-6 : f32
    %27 = vector.broadcast %cst_11 : f32 to vector<1x32xf32>
    %28 = arith.addf %25, %27 : vector<1x32xf32>
    %29 = math.rsqrt %28 : vector<1x32xf32>
    %30 = arith.mulf %26, %29 : vector<1x32xf32>
    %31 = vector.broadcast %30 : vector<1x32xf32> to vector<8x32xf32>
    %32 = arith.mulf %14, %31 : vector<8x32xf32>
    %c0_12 = arith.constant 0 : index
    %c0_13 = arith.constant 0 : index
    %33 = vector.load %arg5[%c0_12, %c0_13] : memref<1x32xf32, #tpu.memory_space<vmem>>, vector<1x32xf32>
    %34 = arith.mulf %18, %30 : vector<1x32xf32>
    %35 = arith.subf %33, %34 : vector<1x32xf32>
    %36 = vector.broadcast %35 : vector<1x32xf32> to vector<8x32xf32>
    %37 = arith.addf %32, %36 : vector<8x32xf32>
    %cst_14 = arith.constant 0.000000e+00 : f32
    %38 = vector.broadcast %cst_14 : f32 to vector<8x32xf32>
    %39 = arith.cmpf oge, %37, %38 : vector<8x32xf32>
    %cst_15 = arith.constant 0.00999999977 : f32
    %40 = vector.broadcast %cst_15 : f32 to vector<8x32xf32>
    %41 = arith.mulf %40, %37 : vector<8x32xf32>
    %42 = arith.select %39, %37, %41 : vector<8x32xi1>, vector<8x32xf32>
    %c0_16 = arith.constant 0 : index
    %c0_17 = arith.constant 0 : index
    %43 = vector.load %arg6[%c0_16, %c0_17] : memref<32x32xf32, #tpu.memory_space<vmem>>, vector<32x32xf32>
    %cst_18 = arith.constant dense<0.000000e+00> : vector<8x32xf32>
    %44 = tpu.matmul %42, %43, %cst_18 {dimension_numbers = #tpu.dot_dimension_numbers<[1], [0], [0], [1], [0, 0, 1, 1], [], []>} : vector<8x32xf32>, vector<32x32xf32>, vector<8x32xf32> -> vector<8x32xf32>
    %c0_19 = arith.constant 0 : index
    %c0_20 = arith.constant 0 : index
    %45 = vector.load %arg7[%c0_19, %c0_20] : memref<1x32xf32, #tpu.memory_space<vmem>>, vector<1x32xf32>
    %46 = vector.broadcast %45 : vector<1x32xf32> to vector<8x32xf32>
    %47 = arith.addf %44, %46 : vector<8x32xf32>
    %cst_21 = arith.constant dense<0.000000e+00> : vector<32xf32>
    %48 = vector.multi_reduction <add>, %47, %cst_21 [0] : vector<8x32xf32> to vector<32xf32>
    %49 = vector.shape_cast %48 : vector<32xf32> to vector<1x32xf32>
    %cst_22 = arith.constant 1.250000e-01 : f32
    %50 = vector.broadcast %cst_22 : f32 to vector<1x32xf32>
    %51 = arith.mulf %49, %50 : vector<1x32xf32>
    %52 = vector.broadcast %51 : vector<1x32xf32> to vector<8x32xf32>
    %53 = arith.subf %47, %52 : vector<8x32xf32>
    %54 = arith.mulf %53, %53 : vector<8x32xf32>
    %cst_23 = arith.constant dense<0.000000e+00> : vector<32xf32>
    %55 = vector.multi_reduction <add>, %54, %cst_23 [0] : vector<8x32xf32> to vector<32xf32>
    %56 = vector.shape_cast %55 : vector<32xf32> to vector<1x32xf32>
    %cst_24 = arith.constant 1.250000e-01 : f32
    %57 = vector.broadcast %cst_24 : f32 to vector<1x32xf32>
    %58 = arith.mulf %56, %57 : vector<1x32xf32>
    %c0_25 = arith.constant 0 : index
    %c0_26 = arith.constant 0 : index
    %59 = vector.load %arg8[%c0_25, %c0_26] : memref<1x32xf32, #tpu.memory_space<vmem>>, vector<1x32xf32>
    %cst_27 = arith.constant 9.99999974E-6 : f32
    %60 = vector.broadcast %cst_27 : f32 to vector<1x32xf32>
    %61 = arith.addf %58, %60 : vector<1x32xf32>
    %62 = math.rsqrt %61 : vector<1x32xf32>
    %63 = arith.mulf %59, %62 : vector<1x32xf32>
    %64 = vector.broadcast %63 : vector<1x32xf32> to vector<8x32xf32>
    %65 = arith.mulf %47, %64 : vector<8x32xf32>
    %c0_28 = arith.constant 0 : index
    %c0_29 = arith.constant 0 : index
    %66 = vector.load %arg9[%c0_28, %c0_29] : memref<1x32xf32, #tpu.memory_space<vmem>>, vector<1x32xf32>
    %67 = arith.mulf %51, %63 : vector<1x32xf32>
    %68 = arith.subf %66, %67 : vector<1x32xf32>
    %69 = vector.broadcast %68 : vector<1x32xf32> to vector<8x32xf32>
    %70 = arith.addf %65, %69 : vector<8x32xf32>
    %cst_30 = arith.constant 0.000000e+00 : f32
    %71 = vector.broadcast %cst_30 : f32 to vector<8x32xf32>
    %72 = arith.cmpf oge, %70, %71 : vector<8x32xf32>
    %cst_31 = arith.constant 0.00999999977 : f32
    %73 = vector.broadcast %cst_31 : f32 to vector<8x32xf32>
    %74 = arith.mulf %73, %70 : vector<8x32xf32>
    %75 = arith.select %72, %70, %74 : vector<8x32xi1>, vector<8x32xf32>
    %c0_32 = arith.constant 0 : index
    %c0_33 = arith.constant 0 : index
    %76 = vector.load %arg10[%c0_32, %c0_33] : memref<32x256xf32, #tpu.memory_space<vmem>>, vector<32x256xf32>
    %cst_34 = arith.constant dense<0.000000e+00> : vector<8x256xf32>
    %77 = tpu.matmul %75, %76, %cst_34 {dimension_numbers = #tpu.dot_dimension_numbers<[1], [0], [0], [1], [0, 0, 1, 1], [], []>} : vector<8x32xf32>, vector<32x256xf32>, vector<8x256xf32> -> vector<8x256xf32>
    %c0_35 = arith.constant 0 : index
    %c0_36 = arith.constant 0 : index
    %78 = vector.load %arg11[%c0_35, %c0_36] : memref<1x256xf32, #tpu.memory_space<vmem>>, vector<1x256xf32>
    %79 = vector.broadcast %78 : vector<1x256xf32> to vector<8x256xf32>
    %80 = arith.addf %77, %79 : vector<8x256xf32>
    %81 = vector.extract_strided_slice %80 {offsets = [0, 0], sizes = [8, 128], strides = [1, 1]} : vector<8x256xf32> to vector<8x128xf32>
    %c0_37 = arith.constant 0 : index
    %c0_38 = arith.constant 0 : index
    %82 = vector.load %arg12[%c0_37, %c0_38] : memref<8x128xf32, #tpu.memory_space<vmem>>, vector<8x128xf32>
    tpu.vector_store %arg12[%c0_37, %c0_38], %81 {strides = array<i32>} : memref<8x128xf32, #tpu.memory_space<vmem>>, vector<8x128xf32>,
    %83 = vector.extract_strided_slice %80 {offsets = [0, 128], sizes = [8, 128], strides = [1, 1]} : vector<8x256xf32> to vector<8x128xf32>
    %cst_39 = arith.constant 2.000000e+01 : f32
    %84 = vector.broadcast %cst_39 : f32 to vector<8x128xf32>
    %85 = arith.cmpf ogt, %83, %84 : vector<8x128xf32>
    %cst_40 = arith.constant 2.000000e+01 : f32
    %86 = vector.broadcast %cst_40 : f32 to vector<8x128xf32>
    %87 = arith.minimumf %83, %86 : vector<8x128xf32>
    %88 = math.exp %87 : vector<8x128xf32>
    %89 = math.log1p %88 : vector<8x128xf32>
    %90 = arith.select %85, %83, %89 : vector<8x128xi1>, vector<8x128xf32>
    %c0_41 = arith.constant 0 : index
    %c0_42 = arith.constant 0 : index
    %91 = vector.load %arg13[%c0_41, %c0_42] : memref<8x128xf32, #tpu.memory_space<vmem>>, vector<8x128xf32>
    tpu.vector_store %arg13[%c0_41, %c0_42], %90 {strides = array<i32>} : memref<8x128xf32, #tpu.memory_space<vmem>>, vector<8x128xf32>,
    return
  }
  func.func @transform_0(%arg0: i32) -> (i32, i32) {
    %c0_i32 = arith.constant 0 : i32
    %c0_i32_0 = arith.constant 0 : i32
    %c0_i32_1 = arith.constant 0 : i32
    return %c0_i32, %c0_i32_0 : i32, i32
  }
  func.func @transform_1(%arg0: i32) -> (i32, i32) {
    %c0_i32 = arith.constant 0 : i32
    %c0_i32_0 = arith.constant 0 : i32
    %c0_i32_1 = arith.constant 0 : i32
    return %c0_i32, %c0_i32_0 : i32, i32
  }
  func.func @transform_2(%arg0: i32) -> (i32, i32) {
    %c0_i32 = arith.constant 0 : i32
    %c0_i32_0 = arith.constant 0 : i32
    %c0_i32_1 = arith.constant 0 : i32
    return %c0_i32, %c0_i32_0 : i32, i32
  }
  func.func @transform_3(%arg0: i32) -> (i32, i32) {
    %c0_i32 = arith.constant 0 : i32
    %c0_i32_0 = arith.constant 0 : i32
    %c0_i32_1 = arith.constant 0 : i32
    return %c0_i32, %c0_i32_0 : i32, i32
  }
  func.func @transform_4(%arg0: i32) -> (i32, i32) {
    %c0_i32 = arith.constant 0 : i32
    %c0_i32_0 = arith.constant 0 : i32
    %c0_i32_1 = arith.constant 0 : i32
    return %c0_i32, %c0_i32_0 : i32, i32
  }
  func.func @transform_5(%arg0: i32) -> (i32, i32) {
    %c0_i32 = arith.constant 0 : i32
    %c0_i32_0 = arith.constant 0 : i32
    %c0_i32_1 = arith.constant 0 : i32
    return %c0_i32, %c0_i32_0 : i32, i32
  }
  func.func @transform_6(%arg0: i32) -> (i32, i32) {
    %c0_i32 = arith.constant 0 : i32
    %c0_i32_0 = arith.constant 0 : i32
    %c0_i32_1 = arith.constant 0 : i32
    return %c0_i32, %c0_i32_0 : i32, i32
  }
  func.func @transform_7(%arg0: i32) -> (i32, i32) {
    %c0_i32 = arith.constant 0 : i32
    %c0_i32_0 = arith.constant 0 : i32
    %c0_i32_1 = arith.constant 0 : i32
    return %c0_i32, %c0_i32_0 : i32, i32
  }
  func.func @transform_8(%arg0: i32) -> (i32, i32) {
    %c0_i32 = arith.constant 0 : i32
    %c0_i32_0 = arith.constant 0 : i32
    %c0_i32_1 = arith.constant 0 : i32
    return %c0_i32, %c0_i32_0 : i32, i32
  }
  func.func @transform_9(%arg0: i32) -> (i32, i32) {
    %c0_i32 = arith.constant 0 : i32
    %c0_i32_0 = arith.constant 0 : i32
    %c0_i32_1 = arith.constant 0 : i32
    return %c0_i32, %c0_i32_0 : i32, i32
  }
  func.func @transform_10(%arg0: i32) -> (i32, i32) {
    %c0_i32 = arith.constant 0 : i32
    %c0_i32_0 = arith.constant 0 : i32
    %c0_i32_1 = arith.constant 0 : i32
    return %c0_i32, %c0_i32_0 : i32, i32
  }
  func.func @transform_11(%arg0: i32) -> (i32, i32) {
    %c0_i32 = arith.constant 0 : i32
    %c0_i32_0 = arith.constant 0 : i32
    %c0_i32_1 = arith.constant 0 : i32
    return %c0_i32, %c0_i32_0 : i32, i32
  }
  func.func @transform_12(%arg0: i32) -> (i32, i32) {
    %c0_i32 = arith.constant 0 : i32
    %c0_i32_0 = arith.constant 0 : i32
    %c0_i32_1 = arith.constant 0 : i32
    return %c0_i32, %c0_i32_0 : i32, i32
  }
}

</mosaic_0001>

<llo_original>
// kernel: tpu_custom_call.1
$region0: #{tpu_custom_call.1}
  #allocation0 [shape = 'u32[]', space=smem, size = 0x4, offset = 0x4, fixed_abs, tag = 'smem constant byte address 0x4 - core index']
  #allocation1 [shape = 'u32[72,128]{1,0:T(1,128)}', space=vmem, size = 0x9000, scoped, tag = 'internal scratch']
  %s0 = inlined_call_operand.vmem [shape: f32[8,2], index: 0, kind: input, shape index: {}]
  %s1 = inlined_call_operand.vmem [shape: f32[2,32], index: 1, kind: input, shape index: {}]
  %s2 = inlined_call_operand.vmem [shape: f32[1,32], index: 2, kind: input, shape index: {}]
  %s3 = inlined_call_operand.vmem [shape: f32[1,32], index: 3, kind: input, shape index: {}]
  %s4 = inlined_call_operand.vmem [shape: f32[1,32], index: 4, kind: input, shape index: {}]
  %s5 = inlined_call_operand.hbm [shape: f32[32,32], index: 5, kind: input, shape index: {}]
  %s6 = inlined_call_operand.vmem [shape: f32[1,32], index: 6, kind: input, shape index: {}]
  %s7 = inlined_call_operand.vmem [shape: f32[1,32], index: 7, kind: input, shape index: {}]
  %s8 = inlined_call_operand.vmem [shape: f32[1,32], index: 8, kind: input, shape index: {}]
  %s9 = inlined_call_operand.hbm [shape: f32[32,256], index: 9, kind: input, shape index: {}]
  %s10 = inlined_call_operand.vmem [shape: f32[1,256], index: 10, kind: input, shape index: {}]
  %s11 = inlined_call_operand.hbm [shape: f32[8,128], index: 11, kind: output, shape index: {0}]
  %s12 = inlined_call_operand.hbm [shape: f32[8,128], index: 12, kind: output, shape index: {1}]
  %13 = xla_tuple %s11, %s12
  %s14 = sld [smem:[#allocation0]]
  $region70: #{tpu_custom_call.1} parent=0
    _
  %s16 = ssub.s32 1, %s14
  %s17 = scalar_select 0, %s16, %s14
  $region1: #{tpu_custom_call.1} parent=0
    #allocation2 [shape = 'u8[16384]{0}', space=vmem, size = 0x4000, scoped, tag = 'input window, operand 5, single buffered']
    #allocation3 [shape = 's32[1]{0}', space=sflag, size = 0x4, scoped, tag = 'scoped memory for tpu_custom_call.1']
    #allocation4 [shape = 's32[1]{0}', space=sflag, size = 0x4, scoped, tag = 'scoped memory for tpu_custom_call.1']
    #allocation5 [shape = 'u8[32768]{0}', space=vmem, size = 0x8000, scoped, tag = 'input window, operand 9, single buffered']
    #allocation6 [shape = 's32[1]{0}', space=sflag, size = 0x4, scoped, tag = 'scoped memory for tpu_custom_call.1']
    #allocation7 [shape = 'u8[4096]{0}', space=vmem, size = 0x1000, scoped, tag = 'output window, operand 0, single buffered']
    #allocation8 [shape = 'u8[4096]{0}', space=vmem, size = 0x1000, scoped, tag = 'output window, operand 1, single buffered']
    #allocation9 [shape = 's32[1]{0}', space=sflag, size = 0x4, scoped, tag = 'scoped memory for tpu_custom_call.1']
    %18 = vsyncpa [#allocation3], 0
    %19 = vsyncpa [#allocation6], 0
    %20 = vsyncpa [#allocation4], 0
    %21 = vsyncpa [#allocation9], 0
    // Predicated region
    $region2: #{tpu_custom_call.1} parent=1 // pred_check
      _
    $region3: #{tpu_custom_call.1} parent=1 // pred_check_branch
      %23 = sbr.rel (0) target = $region5
    $region4: #{tpu_custom_call.1} parent=1 // pred_region
      _
    $region5: #{tpu_custom_call.1} parent=1 // pred_fallthru
      _
    // Predicated region
    $region6: #{tpu_custom_call.1} parent=1 // pred_check
      _
    $region7: #{tpu_custom_call.1} parent=1 // pred_check_branch
      %25 = sbr.rel (0) target = $region9
    $region8: #{tpu_custom_call.1} parent=1 // pred_region
      _
    $region9: #{tpu_custom_call.1} parent=1 // pred_fallthru
      _
    // Predicated region
    $region10: #{tpu_custom_call.1} parent=1 // pred_check
      _
    $region11: #{tpu_custom_call.1} parent=1 // pred_check_branch
      %27 = sbr.rel (0) target = $region13
    $region12: #{tpu_custom_call.1} parent=1 // pred_region
      _
    $region13: #{tpu_custom_call.1} parent=1 // pred_fallthru
      _
    // Predicated region
    $region14: #{tpu_custom_call.1} parent=1 // pred_check
      _
    $region15: #{tpu_custom_call.1} parent=1 // pred_check_branch
      %29 = sbr.rel (0) target = $region17
    $region16: #{tpu_custom_call.1} parent=1 // pred_region
      _
    $region17: #{tpu_custom_call.1} parent=1 // pred_fallthru
      _
    // Predicated region
    $region18: #{tpu_custom_call.1} parent=1 // pred_check
      _
    $region19: #{tpu_custom_call.1} parent=1 // pred_check_branch
      %31 = sbr.rel (0) target = $region21
    $region20: #{tpu_custom_call.1} parent=1 // pred_region
      _
    $region21: #{tpu_custom_call.1} parent=1 // pred_fallthru
      _
    // Predicated region
    $region22: #{tpu_custom_call.1} parent=1 // pred_check
      _
    $region23: #{tpu_custom_call.1} parent=1 // pred_check_branch
      %33 = sbr.rel (0) target = $region25
    $region24: #{tpu_custom_call.1} parent=1 // pred_region
      %35 = vsyncadd [#allocation3], 0
      %s36 = sshll.u32 %s5, 4
      %s37 = int_to_ptr.hbm [resolvable:$true] %s36
      %s38 = sshll.u32 [#allocation2], 4
      %s39 = int_to_ptr.vmem [resolvable:$true] %s38
      %44 = dma.hbm_to_vmem [thread:$0]  %s37, 512, %s39, [#allocation3], 128, 128, 8
    $region25: #{tpu_custom_call.1} parent=1 // pred_fallthru
      _
    // Predicated region
    $region26: #{tpu_custom_call.1} parent=1 // pred_check
      _
    $region27: #{tpu_custom_call.1} parent=1 // pred_check_branch
      %46 = sbr.rel (0) target = $region29
    $region28: #{tpu_custom_call.1} parent=1 // pred_region
      _
    $region29: #{tpu_custom_call.1} parent=1 // pred_fallthru
      _
    // Predicated region
    $region30: #{tpu_custom_call.1} parent=1 // pred_check
      _
    $region31: #{tpu_custom_call.1} parent=1 // pred_check_branch
      %48 = sbr.rel (0) target = $region33
    $region32: #{tpu_custom_call.1} parent=1 // pred_region
      _
    $region33: #{tpu_custom_call.1} parent=1 // pred_fallthru
      _
    // Predicated region
    $region34: #{tpu_custom_call.1} parent=1 // pred_check
      _
    $region35: #{tpu_custom_call.1} parent=1 // pred_check_branch
      %50 = sbr.rel (0) target = $region37
    $region36: #{tpu_custom_call.1} parent=1 // pred_region
      _
    $region37: #{tpu_custom_call.1} parent=1 // pred_fallthru
      _
    // Predicated region
    $region38: #{tpu_custom_call.1} parent=1 // pred_check
      _
    $region39: #{tpu_custom_call.1} parent=1 // pred_check_branch
      %52 = sbr.rel (0) target = $region41
    $region40: #{tpu_custom_call.1} parent=1 // pred_region
      %54 = vsyncadd [#allocation6], 0
      %s55 = sshll.u32 %s9, 4
      %s56 = int_to_ptr.hbm [resolvable:$true] %s55
      %s57 = sshll.u32 [#allocation5], 4
      %s58 = int_to_ptr.vmem [resolvable:$true] %s57
      %63 = dma.hbm_to_vmem [thread:$0]  %s56, 1024, %s58, [#allocation6], 256, 256, 16
    $region41: #{tpu_custom_call.1} parent=1 // pred_fallthru
      _
    // Predicated region
    $region42: #{tpu_custom_call.1} parent=1 // pred_check
      _
    $region43: #{tpu_custom_call.1} parent=1 // pred_check_branch
      %65 = sbr.rel (0) target = $region45
    $region44: #{tpu_custom_call.1} parent=1 // pred_region
      _
    $region45: #{tpu_custom_call.1} parent=1 // pred_fallthru
      _
    // Predicated region
    $region46: #{tpu_custom_call.1} parent=1 // pred_check
      _
    $region47: #{tpu_custom_call.1} parent=1 // pred_check_branch
      %67 = sbr.rel (0) target = $region49
    $region48: #{tpu_custom_call.1} parent=1 // pred_region
      %69 = dma.done [#allocation3], 512
    $region49: #{tpu_custom_call.1} parent=1 // pred_fallthru
      _
    // Predicated region
    $region50: #{tpu_custom_call.1} parent=1 // pred_check
      _
    $region51: #{tpu_custom_call.1} parent=1 // pred_check_branch
      %71 = sbr.rel (0) target = $region53
    $region52: #{tpu_custom_call.1} parent=1 // pred_region
      %73 = dma.done [#allocation6], 1024
    $region53: #{tpu_custom_call.1} parent=1 // pred_fallthru
      _
    %v74 = vld [vmem:[%s0] sm:$0xff]
    %v75 = vld [vmem:[%s1] sm:$0x1]
    %77 = vset.pattern.permute.xlu0 0
    %78 = vperm.xlu0 %77, %v74
    %v79 = vpop.permute.xlu0 %78
    %v81 = vperm.slane %v75, 0
    %v82 = vmul.f32 %v79, %v81
    %v83 = vld [vmem:[%s1 + $0x1] sm:$0x1]
    %84 = vset.pattern.permute.xlu0 1
    %85 = vperm.xlu0 %84, %v74
    %v86 = vpop.permute.xlu0 %85
    %v88 = vperm.slane %v83, 0
    %v89 = vmul.f32 %v86, %v88
    %v90 = vadd.f32 %v82, %v89
    %v91 = vld [vmem:[%s2] sm:$0x1]
    %v93 = vperm.slane %v91, 0
    %v95 = vadd.f32 %v90, %v93
    %vm96 = vcmask 261120
    %v97 = vsel %vm96, %v95, 0.0
    %v98 = vrot.slane %v97, 4
    %v99 = vadd.f32 %v97, %v98
    %v100 = vrot.slane %v99, 2
    %v101 = vadd.f32 %v99, %v100
    %v102 = vrot.slane %v101, 1
    %v103 = vadd.f32 %v101, %v102
    %v104 = vmul.f32 %v103, 0.125
    %v105 = vsub.f32 %v95, %v104
    %v106 = vmul.f32 %v105, %v105
    %v107 = vsel %vm96, %v106, 0.0
    %v108 = vrot.slane %v107, 4
    %v109 = vadd.f32 %v107, %v108
    %v110 = vrot.slane %v109, 2
    %v111 = vadd.f32 %v109, %v110
    %v112 = vrot.slane %v111, 1
    %v113 = vadd.f32 %v111, %v112
    %v114 = vmul.f32 %v113, 0.125
    %v115 = vld [vmem:[%s3] sm:$0x1]
    %v116 = vadd.f32 %v114, 1e-05
    %v117 = vrsqrt.pop %v116
    %v118 = vmul.f32 %v117, %v116
    %v119 = vmul.f32 %v118, %v117
    %v120 = vmul.f32 0.5, %v119
    %v121 = vsub.f32 1.5, %v120
    %v122 = vmul.f32 %v117, %v121
    %vm123 = vweird.f32 %v116
    %vm124 = vweird.f32 %v117
    %vm125 = vmor %vm123, %vm124
    %v126 = vsel %vm125, %v117, %v122
    %v127 = vmul.f32 %v115, %v126
    %v129 = vperm.slane %v127, 0
    %v131 = vmul.f32 %v95, %v129
    %v132 = vld [vmem:[%s4] sm:$0x1]
    %v133 = vmul.f32 %v104, %v127
    %v134 = vsub.f32 %v132, %v133
    %v136 = vperm.slane %v134, 0
    %v138 = vadd.f32 %v131, %v136
    %vm139 = vcmp.ge.f32.partialorder %v138, 0.0
    %v140 = vmul.f32 %v138, 0.01
    %v141 = vsel %vm139, %v138, %v140
    %v142 = vld [vmem:[#allocation2] sm:$0xff]
    %v143 = vld [vmem:[#allocation2 + $0x8] sm:$0xff]
    %v144 = vld [vmem:[#allocation2 + $0x10] sm:$0xff]
    %v145 = vld [vmem:[#allocation2 + $0x18] sm:$0xff]
    %v146 = vld [vmem:[%s6] sm:$0x1]
    %v148 = vperm.slane %v146, 0
    %v151 = vsel %vm96, %v141, 0
    %153 = vmatpush.msra.mxu0 0.0
    %154 = vmatpush.msra.mxu0 0.0
    %155 = vmatpush.msra.mxu0 0.0
    %156 = vmatpush.msra.mxu0 0.0
    %157 = vmatpush.msra.mxu0 0.0
    %158 = vmatpush.msra.mxu0 0.0
    %159 = vmatpush.msra.mxu0 0.0
    %160 = vmatpush.msra.mxu0 0.0
    %161 = vmatpush.msra.mxu0 0.0
    %162 = vmatpush.msra.mxu0 0.0
    %163 = vmatpush.msra.mxu0 0.0
    %164 = vmatpush.msra.mxu0 0.0
    %165 = vmatpush.msra.mxu0 %v145
    %166 = vmatpush.msra.mxu0 %v144
    %167 = vmatpush.msra.mxu0 %v143
    %168 = vmatpush.msra.mxu0 %v142
    %169 = vmatmul.f32.gmra.mxu0 %v151
    %v170 = vpop.f32.mrf.mxu0
    %v171 = vadd.f32 %v148, %v170
    %172 = vdwg.mxu0
    %v173 = vsel %vm96, %v171, 0.0
    %v174 = vrot.slane %v173, 4
    %v175 = vadd.f32 %v173, %v174
    %v176 = vrot.slane %v175, 2
    %v177 = vadd.f32 %v175, %v176
    %v178 = vrot.slane %v177, 1
    %v179 = vadd.f32 %v177, %v178
    %v180 = vmul.f32 %v179, 0.125
    %v181 = vsub.f32 %v171, %v180
    %v182 = vmul.f32 %v181, %v181
    %v183 = vsel %vm96, %v182, 0.0
    %v184 = vrot.slane %v183, 4
    %v185 = vadd.f32 %v183, %v184
    %v186 = vrot.slane %v185, 2
    %v187 = vadd.f32 %v185, %v186
    %v188 = vrot.slane %v187, 1
    %v189 = vadd.f32 %v187, %v188
    %v190 = vmul.f32 %v189, 0.125
    %v191 = vld [vmem:[%s7] sm:$0x1]
    %v192 = vadd.f32 %v190, 1e-05
    %v193 = vrsqrt.pop %v192
    %v194 = vmul.f32 %v193, %v192
    %v195 = vmul.f32 %v194, %v193
    %v196 = vmul.f32 0.5, %v195
    %v197 = vsub.f32 1.5, %v196
    %v198 = vmul.f32 %v193, %v197
    %vm199 = vweird.f32 %v192
    %vm200 = vweird.f32 %v193
    %vm201 = vmor %vm199, %vm200
    %v202 = vsel %vm201, %v193, %v198
    %v203 = vmul.f32 %v191, %v202
    %v205 = vperm.slane %v203, 0
    %v207 = vmul.f32 %v171, %v205
    %v208 = vld [vmem:[%s8] sm:$0x1]
    %v209 = vmul.f32 %v180, %v203
    %v210 = vsub.f32 %v208, %v209
    %v212 = vperm.slane %v210, 0
    %v214 = vadd.f32 %v207, %v212
    %vm215 = vcmp.ge.f32.partialorder %v214, 0.0
    %v216 = vmul.f32 %v214, 0.01
    %v217 = vsel %vm215, %v214, %v216
    %v218 = vld [vmem:[#allocation5] sm:$0xff]
    %v219 = vld [vmem:[#allocation5 + $0x8] sm:$0xff]
    %v220 = vld [vmem:[#allocation5 + $0x10] sm:$0xff]
    %v221 = vld [vmem:[#allocation5 + $0x18] sm:$0xff]
    %v222 = vld [vmem:[#allocation5 + $0x20] sm:$0xff]
    %v223 = vld [vmem:[#allocation5 + $0x28] sm:$0xff]
    %v224 = vld [vmem:[#allocation5 + $0x30] sm:$0xff]
    %v225 = vld [vmem:[#allocation5 + $0x38] sm:$0xff]
    %v226 = vld [vmem:[%s10] sm:$0x3]
    %v228 = vperm.slane %v226, 0
    %v229 = vperm.slane %v226, 1
    %v233 = vsel %vm96, %v217, 0
    %235 = vmatpush.msra.mxu0 0.0
    %236 = vmatpush.msra.mxu0 0.0
    %237 = vmatpush.msra.mxu0 0.0
    %238 = vmatpush.msra.mxu0 0.0
    %239 = vmatpush.msra.mxu0 0.0
    %240 = vmatpush.msra.mxu0 0.0
    %241 = vmatpush.msra.mxu0 0.0
    %242 = vmatpush.msra.mxu0 0.0
    %243 = vmatpush.msra.mxu0 0.0
    %244 = vmatpush.msra.mxu0 0.0
    %245 = vmatpush.msra.mxu0 0.0
    %246 = vmatpush.msra.mxu0 0.0
    %247 = vmatpush.msra.mxu0 %v224
    %248 = vmatpush.msra.mxu0 %v222
    %249 = vmatpush.msra.mxu0 %v220
    %250 = vmatpush.msra.mxu0 %v218
    %251 = vmatmul.f32.gmra.mxu0 %v233
    %v252 = vpop.f32.mrf.mxu0
    %v253 = vadd.f32 %v228, %v252
    %254 = vdwg.mxu0
    %255 = vmatpush.msra.mxu0 0.0
    %256 = vmatpush.msra.mxu0 0.0
    %257 = vmatpush.msra.mxu0 0.0
    %258 = vmatpush.msra.mxu0 0.0
    %259 = vmatpush.msra.mxu0 0.0
    %260 = vmatpush.msra.mxu0 0.0
    %261 = vmatpush.msra.mxu0 0.0
    %262 = vmatpush.msra.mxu0 0.0
    %263 = vmatpush.msra.mxu0 0.0
    %264 = vmatpush.msra.mxu0 0.0
    %265 = vmatpush.msra.mxu0 0.0
    %266 = vmatpush.msra.mxu0 0.0
    %267 = vmatpush.msra.mxu0 %v225
    %268 = vmatpush.msra.mxu0 %v223
    %269 = vmatpush.msra.mxu0 %v221
    %270 = vmatpush.msra.mxu0 %v219
    %271 = vmatmul.f32.gmra.mxu0 %v233
    %v272 = vpop.f32.mrf.mxu0
    %v273 = vadd.f32 %v229, %v272
    %274 = vdwg.mxu0
    %275 = vst [vmem:[#allocation7] sm:$0xff] %v253
    %vm276 = vcmp.gt.f32.partialorder %v273, 20.0
    %v277 = vmin.f32 %v273, 20.0
    %v278 = vmul.f32 %v277, 1.442695
    %v279 = vpow.pop %v278
    %v280 = vadd.f32 %v279, 1.0
    %v281 = vlog2.pop %v280
    %v282 = vmul.f32 %v281, 0.6931472
    %v283 = vmul.f32 -0.5, %v279
    %v284 = vadd.f32 %v283, 1.0
    %v285 = vmul.f32 %v284, %v279
    %v286 = vand.u32 2147483647, %v279
    %vm287 = vcmp.lt.f32.partialorder %v286, 0.0004427343
    %v288 = vsel %vm287, %v285, %v282
    %v289 = vsel %vm276, %v273, %v288
    %290 = vst [vmem:[#allocation8] sm:$0xff] %v289
    // Predicated region
    $region54: #{tpu_custom_call.1} parent=1 // pred_check
      _
    $region55: #{tpu_custom_call.1} parent=1 // pred_check_branch
      %292 = sbr.rel (0) target = $region57
    $region56: #{tpu_custom_call.1} parent=1 // pred_region
      %294 = vsyncadd [#allocation4], 0
      %s296 = sshll.u32 [#allocation7], 4
      %s297 = int_to_ptr.vmem [resolvable:$true] %s296
      %s298 = sshll.u32 %s11, 4
      %s299 = int_to_ptr.hbm [resolvable:$true] %s298
      %301 = dma.vmem_to_hbm [thread:$0]  %s297, 128, %s299, [#allocation4]
    $region57: #{tpu_custom_call.1} parent=1 // pred_fallthru
      _
    // Predicated region
    $region58: #{tpu_custom_call.1} parent=1 // pred_check
      _
    $region59: #{tpu_custom_call.1} parent=1 // pred_check_branch
      %303 = sbr.rel (0) target = $region61
    $region60: #{tpu_custom_call.1} parent=1 // pred_region
      %305 = vsyncadd [#allocation9], 0
      %s307 = sshll.u32 [#allocation8], 4
      %s308 = int_to_ptr.vmem [resolvable:$true] %s307
      %s309 = sshll.u32 %s12, 4
      %s310 = int_to_ptr.hbm [resolvable:$true] %s309
      %312 = dma.vmem_to_hbm [thread:$0]  %s308, 128, %s310, [#allocation9]
    $region61: #{tpu_custom_call.1} parent=1 // pred_fallthru
      _
    // Predicated region
    $region62: #{tpu_custom_call.1} parent=1 // pred_check
      _
    $region63: #{tpu_custom_call.1} parent=1 // pred_check_branch
      %314 = sbr.rel (0) target = $region65
    $region64: #{tpu_custom_call.1} parent=1 // pred_region
      %316 = dma.done [#allocation4], 128
    $region65: #{tpu_custom_call.1} parent=1 // pred_fallthru
      _
    // Predicated region
    $region66: #{tpu_custom_call.1} parent=1 // pred_check
      _
    $region67: #{tpu_custom_call.1} parent=1 // pred_check_branch
      %318 = sbr.rel (0) target = $region69
    $region68: #{tpu_custom_call.1} parent=1 // pred_region
      %320 = dma.done [#allocation9], 128
    $region69: #{tpu_custom_call.1} parent=1 // pred_fallthru
      _
    %321 = vsyncpa [#allocation3], 1
    %322 = vsyncpa [#allocation6], 1
    %323 = vsyncpa [#allocation4], 1
    %324 = vsyncpa [#allocation9], 1

</llo_original>
